<compile_context>
chip_gen: v5e
topology: v5e:2x2
jax: 0.10.0
libtpu: 0.0.40
codegen_flags: <defaults>
</compile_context>

<pallas_src>
import jax
import jax.numpy as jnp
from jax.experimental import pallas as pl
from jax.experimental.pallas import tpu as pltpu

_LANE_CANDIDATES = (512, 256, 128)     # lane-dense last dims (multiples of 128)
_BLOCK_BYTES_CAP = 8 * 1024 * 1024     # per-block cap; 2 in + 2 out bufs ~= 32 MiB
_VMEM_LIMIT_BYTES = 48 * 1024 * 1024   # under v7x 64 MiB physical; fine on v5e/v6e


def _identity_kernel(x_ref, o_ref):
    # Pure tile copy (output aliases input in HBM).
    o_ref[...] = x_ref[...]


def _sublane_min(dtype) -> int:
    # Minimum sublane tile for packed dtypes: f32 -> 8, bf16/f16 -> 16, int8/fp8 -> 32.
    itemsize = jnp.dtype(dtype).itemsize
    return max(8, 32 // itemsize)


def shared_moe_forward(x):
    """Identity forward pass of SharedMoE, executed through a Pallas TPU kernel."""
    orig_shape = x.shape
    orig_dtype = x.dtype

    total = 1
    for d in orig_shape:
        total *= d
    if total == 0:
        # Degenerate empty tensor: nothing to copy.
        return x

    itemsize = jnp.dtype(orig_dtype).itemsize
    sub_min = _sublane_min(orig_dtype)

    # Pick the widest lane that divides the flattened size evenly (no padding).
    lane = None
    for cand in _LANE_CANDIDATES:
        if total % (sub_min * cand) == 0:
            lane = cand
            break

    flat = x.reshape(total)
    if lane is None:
        # Awkward size: pad to a lane-dense quantum at the widest lane width,
        # then slice the padding back off after the copy.
        lane = _LANE_CANDIDATES[0]
        quantum = sub_min * lane
        padded_total = ((total + quantum - 1) // quantum) * quantum
        flat = jnp.pad(flat, (0, padded_total - total))
    else:
        padded_total = total

    rows = padded_total // lane
    x2d = flat.reshape(rows, lane)

    # Largest row-tile (multiple of sub_min) under the per-block byte cap.
    max_tile_rows = max(
        sub_min,
        (_BLOCK_BYTES_CAP // (lane * itemsize)) // sub_min * sub_min,
    )
    tile_rows = min(rows, max_tile_rows)
    grid = (pl.cdiv(rows, tile_rows),)

    out2d = pl.pallas_call(
        _identity_kernel,
        out_shape=jax.ShapeDtypeStruct((rows, lane), orig_dtype),
        grid_spec=pltpu.PrefetchScalarGridSpec(
            num_scalar_prefetch=0,
            grid=grid,
            in_specs=[pl.BlockSpec((tile_rows, lane), lambda i: (i, 0))],
            out_specs=pl.BlockSpec((tile_rows, lane), lambda i: (i, 0)),
        ),
        input_output_aliases={0: 0},  # output reuses the input HBM buffer
        compiler_params=pltpu.CompilerParams(
            dimension_semantics=("parallel",),
            vmem_limit_bytes=_VMEM_LIMIT_BYTES,
        ),
    )(x2d)

    out_flat = out2d.reshape(padded_total)
    if padded_total != total:
        out_flat = out_flat[:total]
    return out_flat.reshape(orig_shape)


if __name__ == "__main__":
    key = jax.random.PRNGKey(0)
    # Small NCHW input consistent with the module's (shape-agnostic) forward.
    x = jax.random.normal(key, (2, 4, 16, 16), dtype=jnp.float32)

    y = shared_moe_forward(x)
    y = jax.block_until_ready(y)

    # Forward is identity: verify exact equality.
    assert y.shape == x.shape and y.dtype == x.dtype
    assert bool(jnp.all(y == x))

    print("KERNEL_OK")
</pallas_src>

<mosaic_0001>
module attributes {stable_mosaic.version = 11 : i64} {
  func.func @_identity_kernel(%arg0: i32, %arg1: memref<8x256xf32, #tpu.memory_space<vmem>>, %arg2: memref<8x256xf32, #tpu.memory_space<vmem>>) attributes {dimension_semantics = [#tpu.dimension_semantics<parallel>], iteration_bounds = array<i64: 1>, scalar_prefetch = 0 : i64, scratch_operands = 0 : i64, tpu.core_type = #tpu.core_type<tc>, window_params = [{transform_indices = @transform_0, window_bounds = array<i64: 8, 256>}, {transform_indices = @transform_1, window_bounds = array<i64: 8, 256>}]} {
    %c0 = arith.constant 0 : index
    %c0_0 = arith.constant 0 : index
    %0 = vector.load %arg1[%c0, %c0_0] : memref<8x256xf32, #tpu.memory_space<vmem>>, vector<8x256xf32>
    %c0_1 = arith.constant 0 : index
    %c0_2 = arith.constant 0 : index
    %1 = vector.load %arg2[%c0_1, %c0_2] : memref<8x256xf32, #tpu.memory_space<vmem>>, vector<8x256xf32>
    tpu.vector_store %arg2[%c0_1, %c0_2], %0 {strides = array<i32>} : memref<8x256xf32, #tpu.memory_space<vmem>>, vector<8x256xf32>,
    return
  }
  func.func @transform_0(%arg0: i32) -> (i32, i32) {
    %c0_i32 = arith.constant 0 : i32
    %c0_i32_0 = arith.constant 0 : i32
    return %arg0, %c0_i32 : i32, i32
  }
  func.func @transform_1(%arg0: i32) -> (i32, i32) {
    %c0_i32 = arith.constant 0 : i32
    %c0_i32_0 = arith.constant 0 : i32
    return %arg0, %c0_i32 : i32, i32
  }
}

</mosaic_0001>

<llo_original>
// kernel: tpu_custom_call.1
$region0: #{tpu_custom_call.1}
  #allocation0 [shape = 'u32[]', space=smem, size = 0x4, offset = 0x4, fixed_abs, tag = 'smem constant byte address 0x4 - core index']
  #allocation1 [shape = 'u32[72,128]{1,0:T(1,128)}', space=vmem, size = 0x9000, scoped, tag = 'internal scratch']
  %s0 = inlined_call_operand.hbm [shape: f32[8,256], index: 0, kind: input, shape index: {}, may-alias: {0,1}]
  %s1 = inlined_call_operand.hbm [shape: f32[8,256], index: 1, kind: output, shape index: {}, may-alias: {0,1}]
  %s2 = sld [smem:[#allocation0]]
  $region18: #{tpu_custom_call.1} parent=0
    _
  %s4 = ssub.s32 1, %s2
  %s5 = scalar_select 0, %s4, %s2
  $region1: #{tpu_custom_call.1} parent=0
    #allocation2 [shape = 'u8[8192]{0}', space=vmem, size = 0x2000, scoped, tag = 'input window, operand 0, single buffered']
    #allocation3 [shape = 's32[1]{0}', space=sflag, size = 0x4, scoped, tag = 'scoped memory for tpu_custom_call.1']
    #allocation4 [shape = 's32[1]{0}', space=sflag, size = 0x4, scoped, tag = 'scoped memory for tpu_custom_call.1']
    #allocation5 [shape = 'u8[8192]{0}', space=vmem, size = 0x2000, scoped, tag = 'output window, operand 0, single buffered']
    %6 = vsyncpa [#allocation3], 0
    %7 = vsyncpa [#allocation4], 0
    // Predicated region
    $region2: #{tpu_custom_call.1} parent=1 // pred_check
      _
    $region3: #{tpu_custom_call.1} parent=1 // pred_check_branch
      %9 = sbr.rel (0) target = $region5
    $region4: #{tpu_custom_call.1} parent=1 // pred_region
      %11 = vsyncadd [#allocation3], 0
      %s13 = sshll.u32 %s0, 4
      %s14 = int_to_ptr.hbm [resolvable:$true] %s13
      %s15 = sshll.u32 [#allocation2], 4
      %s16 = int_to_ptr.vmem [resolvable:$true] %s15
      %18 = dma.hbm_to_vmem [thread:$0]  %s14, 256, %s16, [#allocation3]
    $region5: #{tpu_custom_call.1} parent=1 // pred_fallthru
      _
    // Predicated region
    $region6: #{tpu_custom_call.1} parent=1 // pred_check
      _
    $region7: #{tpu_custom_call.1} parent=1 // pred_check_branch
      %20 = sbr.rel (0) target = $region9
    $region8: #{tpu_custom_call.1} parent=1 // pred_region
      %22 = dma.done [#allocation3], 256
    $region9: #{tpu_custom_call.1} parent=1 // pred_fallthru
      _
    %v23 = vld [vmem:[#allocation2] sm:$0xff]
    %v24 = vld [vmem:[#allocation2 + $0x8] sm:$0xff]
    %25 = vst [vmem:[#allocation5] sm:$0xff] %v23
    %26 = vst [vmem:[#allocation5 + $0x8] sm:$0xff] %v24
    // Predicated region
    $region10: #{tpu_custom_call.1} parent=1 // pred_check
      _
    $region11: #{tpu_custom_call.1} parent=1 // pred_check_branch
      %28 = sbr.rel (0) target = $region13
    $region12: #{tpu_custom_call.1} parent=1 // pred_region
      %30 = vsyncadd [#allocation4], 0
      %s32 = sshll.u32 [#allocation5], 4
      %s33 = int_to_ptr.vmem [resolvable:$true] %s32
      %s34 = sshll.u32 %s1, 4
      %s35 = int_to_ptr.hbm [resolvable:$true] %s34
      %37 = dma.vmem_to_hbm [thread:$0]  %s33, 256, %s35, [#allocation4]
    $region13: #{tpu_custom_call.1} parent=1 // pred_fallthru
      _
    // Predicated region
    $region14: #{tpu_custom_call.1} parent=1 // pred_check
      _
    $region15: #{tpu_custom_call.1} parent=1 // pred_check_branch
      %39 = sbr.rel (0) target = $region17
    $region16: #{tpu_custom_call.1} parent=1 // pred_region
      %41 = dma.done [#allocation4], 256
    $region17: #{tpu_custom_call.1} parent=1 // pred_fallthru
      _
    %42 = vsyncpa [#allocation3], 1
    %43 = vsyncpa [#allocation4], 1

</llo_original>
